<compile_context>
chip_gen: v5e
topology: v5e:2x2
jax: 0.10.0
libtpu: 0.0.40
codegen_flags: <defaults>
</compile_context>

<pallas_src>
import jax
import jax.numpy as jnp
from jax.experimental import pallas as pl
from jax.experimental.pallas import tpu as pltpu


def mlp_kernel(x_ref, w1_ref, b1_ref, w2_ref, b2_ref, w3_ref, b3_ref, o_ref):
    # Layer 1: (TB, In)bf16 @ (In, Hp)bf16 -> f32 acc, +bias, ReLU
    h1 = jnp.dot(x_ref[...], w1_ref[...], preferred_element_type=jnp.float32)
    h1 = jnp.maximum(h1 + b1_ref[...], 0.0).astype(jnp.bfloat16)
    # Layer 2: (TB, Hp) @ (Hp, Hp)
    h2 = jnp.dot(h1, w2_ref[...], preferred_element_type=jnp.float32)
    h2 = jnp.maximum(h2 + b2_ref[...], 0.0).astype(jnp.bfloat16)
    # Layer 3: (TB, Hp) @ (Hp, Op)
    h3 = jnp.dot(h2, w3_ref[...], preferred_element_type=jnp.float32)
    o_ref[...] = jnp.maximum(h3 + b3_ref[...], 0.0).astype(o_ref.dtype)


def _round_up(x, m):
    return ((x + m - 1) // m) * m


def _pad_to(a, shape):
    pads = [(0, t - s) for s, t in zip(a.shape, shape)]
    return jnp.pad(a, pads) if any(p[1] for p in pads) else a


def mlp_forward(x, w1, b1, w2, b2, w3, b3, *, block_b=128):
    """x: (B, in_dim) f32; weights stored as (in, out); biases as (1, out)."""
    B, in_dim = x.shape
    hid = w1.shape[1]
    out_dim = w3.shape[1]

    # Lane-dense feature dims (multiples of 128). Zero-padded columns/rows
    # stay identically zero through ReLU, so semantics are preserved.
    Hp = _round_up(hid, 128)
    Op = _round_up(out_dim, 128)

    w1p = _pad_to(w1, (in_dim, Hp)).astype(jnp.bfloat16)
    b1p = _pad_to(b1, (1, Hp))
    w2p = _pad_to(w2, (Hp, Hp)).astype(jnp.bfloat16)
    b2p = _pad_to(b2, (1, Hp))
    w3p = _pad_to(w3, (Hp, Op)).astype(jnp.bfloat16)
    b3p = _pad_to(b3, (1, Op))

    # Batch tiling: TB rows per grid step (multiple of 8), pad batch to TB*grid.
    TB = block_b if B >= block_b else _round_up(B, 8)
    Bp = _round_up(B, TB)
    xp = _pad_to(x, (Bp, in_dim)).astype(jnp.bfloat16)

    grid = (Bp // TB,)
    row_spec = lambda shape: pl.BlockSpec(shape, lambda i: (i, 0))
    resident = lambda shape: pl.BlockSpec(shape, lambda i: (0, 0))

    out = pl.pallas_call(
        mlp_kernel,
        out_shape=jax.ShapeDtypeStruct((Bp, Op), jnp.float32),
        grid=grid,
        in_specs=[
            row_spec((TB, in_dim)),
            resident(w1p.shape), resident(b1p.shape),
            resident(w2p.shape), resident(b2p.shape),
            resident(w3p.shape), resident(b3p.shape),
        ],
        out_specs=row_spec((TB, Op)),
        compiler_params=pltpu.CompilerParams(
            dimension_semantics=("parallel",),
        ),
    )(xp, w1p, b1p, w2p, b2p, w3p, b3p)

    # Strip batch + lane padding.
    return out[:B, :out_dim]


def init_params(key, input_dim, hidden_dim, out_dim):
    # Deterministic init mimicking nn.Linear's uniform(-1/sqrt(fan_in), +).
    ks = jax.random.split(key, 6)

    def lin(kw, kb, fan_in, fan_out):
        bound = 1.0 / jnp.sqrt(fan_in)
        w = jax.random.uniform(kw, (fan_in, fan_out), jnp.float32, -bound, bound)
        b = jax.random.uniform(kb, (1, fan_out), jnp.float32, -bound, bound)
        return w, b

    w1, b1 = lin(ks[0], ks[1], input_dim, hidden_dim)
    w2, b2 = lin(ks[2], ks[3], hidden_dim, hidden_dim)
    w3, b3 = lin(ks[4], ks[5], hidden_dim, out_dim)
    return w1, b1, w2, b2, w3, b3


def ref_forward(x, w1, b1, w2, b2, w3, b3):
    # Pure-JAX reference mirroring the kernel's bf16-operand / f32-accum math.
    bf = jnp.bfloat16
    h = jnp.dot(x.astype(bf), w1.astype(bf), preferred_element_type=jnp.float32)
    h = jnp.maximum(h + b1, 0.0).astype(bf)
    h = jnp.dot(h, w2.astype(bf), preferred_element_type=jnp.float32)
    h = jnp.maximum(h + b2, 0.0).astype(bf)
    h = jnp.dot(h, w3.astype(bf), preferred_element_type=jnp.float32)
    return jnp.maximum(h + b3, 0.0)


if __name__ == "__main__":
    input_dim, hidden_dim, out_dim = 32, 64, 16
    batch = 8

    key = jax.random.PRNGKey(0)
    kx, kp = jax.random.split(key)
    x = jax.random.normal(kx, (batch, input_dim), jnp.float32)
    params = init_params(kp, input_dim, hidden_dim, out_dim)

    out = mlp_forward(x, *params)
    jax.block_until_ready(out)

    ref = ref_forward(x, *params)
    ref_f32 = x
    w1, b1, w2, b2, w3, b3 = params
    ref_f32 = jnp.maximum(ref_f32 @ w1 + b1, 0.0)
    ref_f32 = jnp.maximum(ref_f32 @ w2 + b2, 0.0)
    ref_f32 = jnp.maximum(ref_f32 @ w3 + b3, 0.0)

    assert out.shape == (batch, out_dim)
    # Exact-ish match against the bf16-matched reference.
    assert jnp.allclose(out, ref, atol=2e-2, rtol=2e-2)
    # Sanity check against the full-f32 reference (bf16 rounding tolerance).
    assert jnp.allclose(out, ref_f32, atol=5e-2, rtol=5e-2)

    print("KERNEL_OK")
</pallas_src>

<mosaic_0001>
module attributes {stable_mosaic.version = 11 : i64} {
  func.func @mlp_kernel(%arg0: i32, %arg1: memref<8x32xbf16, #tpu.memory_space<vmem>>, %arg2: memref<32x128xbf16, #tpu.memory_space<vmem>>, %arg3: memref<1x128xf32, #tpu.memory_space<vmem>>, %arg4: memref<128x128xbf16, #tpu.memory_space<vmem>>, %arg5: memref<1x128xf32, #tpu.memory_space<vmem>>, %arg6: memref<128x128xbf16, #tpu.memory_space<vmem>>, %arg7: memref<1x128xf32, #tpu.memory_space<vmem>>, %arg8: memref<8x128xf32, #tpu.memory_space<vmem>>) attributes {dimension_semantics = [#tpu.dimension_semantics<parallel>], iteration_bounds = array<i64: 1>, scalar_prefetch = 0 : i64, scratch_operands = 0 : i64, tpu.core_type = #tpu.core_type<tc>, window_params = [{transform_indices = @transform_0, window_bounds = array<i64: 8, 32>}, {pipeline_mode = #tpu.pipeline_mode<synchronous>, transform_indices = @transform_1, window_bounds = array<i64: 32, 128>}, {pipeline_mode = #tpu.pipeline_mode<synchronous>, transform_indices = @transform_2, window_bounds = array<i64: 1, 128>}, {pipeline_mode = #tpu.pipeline_mode<synchronous>, transform_indices = @transform_3, window_bounds = array<i64: 128, 128>}, {pipeline_mode = #tpu.pipeline_mode<synchronous>, transform_indices = @transform_4, window_bounds = array<i64: 1, 128>}, {pipeline_mode = #tpu.pipeline_mode<synchronous>, transform_indices = @transform_5, window_bounds = array<i64: 128, 128>}, {pipeline_mode = #tpu.pipeline_mode<synchronous>, transform_indices = @transform_6, window_bounds = array<i64: 1, 128>}, {transform_indices = @transform_7, window_bounds = array<i64: 8, 128>}]} {
    %c0 = arith.constant 0 : index
    %c0_0 = arith.constant 0 : index
    %0 = vector.load %arg1[%c0, %c0_0] : memref<8x32xbf16, #tpu.memory_space<vmem>>, vector<8x32xbf16>
    %c0_1 = arith.constant 0 : index
    %c0_2 = arith.constant 0 : index
    %1 = vector.load %arg2[%c0_1, %c0_2] : memref<32x128xbf16, #tpu.memory_space<vmem>>, vector<32x128xbf16>
    %cst = arith.constant dense<0.000000e+00> : vector<8x128xf32>
    %2 = tpu.matmul %0, %1, %cst {dimension_numbers = #tpu.dot_dimension_numbers<[1], [0], [0], [1], [0, 0, 1, 1], [], []>} : vector<8x32xbf16>, vector<32x128xbf16>, vector<8x128xf32> -> vector<8x128xf32>
    %c0_3 = arith.constant 0 : index
    %c0_4 = arith.constant 0 : index
    %3 = vector.load %arg3[%c0_3, %c0_4] : memref<1x128xf32, #tpu.memory_space<vmem>>, vector<1x128xf32>
    %4 = vector.broadcast %3 : vector<1x128xf32> to vector<8x128xf32>
    %5 = arith.addf %2, %4 : vector<8x128xf32>
    %cst_5 = arith.constant 0.000000e+00 : f32
    %6 = vector.broadcast %cst_5 : f32 to vector<8x128xf32>
    %7 = arith.maximumf %5, %6 : vector<8x128xf32>
    %8 = arith.truncf %7 : vector<8x128xf32> to vector<8x128xbf16>
    %c0_6 = arith.constant 0 : index
    %c0_7 = arith.constant 0 : index
    %9 = vector.load %arg4[%c0_6, %c0_7] : memref<128x128xbf16, #tpu.memory_space<vmem>>, vector<128x128xbf16>
    %cst_8 = arith.constant dense<0.000000e+00> : vector<8x128xf32>
    %10 = tpu.matmul %8, %9, %cst_8 {dimension_numbers = #tpu.dot_dimension_numbers<[1], [0], [0], [1], [0, 0, 1, 1], [], []>} : vector<8x128xbf16>, vector<128x128xbf16>, vector<8x128xf32> -> vector<8x128xf32>
    %c0_9 = arith.constant 0 : index
    %c0_10 = arith.constant 0 : index
    %11 = vector.load %arg5[%c0_9, %c0_10] : memref<1x128xf32, #tpu.memory_space<vmem>>, vector<1x128xf32>
    %12 = vector.broadcast %11 : vector<1x128xf32> to vector<8x128xf32>
    %13 = arith.addf %10, %12 : vector<8x128xf32>
    %cst_11 = arith.constant 0.000000e+00 : f32
    %14 = vector.broadcast %cst_11 : f32 to vector<8x128xf32>
    %15 = arith.maximumf %13, %14 : vector<8x128xf32>
    %16 = arith.truncf %15 : vector<8x128xf32> to vector<8x128xbf16>
    %c0_12 = arith.constant 0 : index
    %c0_13 = arith.constant 0 : index
    %17 = vector.load %arg6[%c0_12, %c0_13] : memref<128x128xbf16, #tpu.memory_space<vmem>>, vector<128x128xbf16>
    %cst_14 = arith.constant dense<0.000000e+00> : vector<8x128xf32>
    %18 = tpu.matmul %16, %17, %cst_14 {dimension_numbers = #tpu.dot_dimension_numbers<[1], [0], [0], [1], [0, 0, 1, 1], [], []>} : vector<8x128xbf16>, vector<128x128xbf16>, vector<8x128xf32> -> vector<8x128xf32>
    %c0_15 = arith.constant 0 : index
    %c0_16 = arith.constant 0 : index
    %19 = vector.load %arg7[%c0_15, %c0_16] : memref<1x128xf32, #tpu.memory_space<vmem>>, vector<1x128xf32>
    %20 = vector.broadcast %19 : vector<1x128xf32> to vector<8x128xf32>
    %21 = arith.addf %18, %20 : vector<8x128xf32>
    %cst_17 = arith.constant 0.000000e+00 : f32
    %22 = vector.broadcast %cst_17 : f32 to vector<8x128xf32>
    %23 = arith.maximumf %21, %22 : vector<8x128xf32>
    %c0_18 = arith.constant 0 : index
    %c0_19 = arith.constant 0 : index
    %24 = vector.load %arg8[%c0_18, %c0_19] : memref<8x128xf32, #tpu.memory_space<vmem>>, vector<8x128xf32>
    tpu.vector_store %arg8[%c0_18, %c0_19], %23 {strides = array<i32>} : memref<8x128xf32, #tpu.memory_space<vmem>>, vector<8x128xf32>,
    return
  }
  func.func @transform_0(%arg0: i32) -> (i32, i32) {
    %c0_i32 = arith.constant 0 : i32
    %c0_i32_0 = arith.constant 0 : i32
    return %arg0, %c0_i32 : i32, i32
  }
  func.func @transform_1(%arg0: i32) -> (i32, i32) {
    %c0_i32 = arith.constant 0 : i32
    %c0_i32_0 = arith.constant 0 : i32
    %c0_i32_1 = arith.constant 0 : i32
    return %c0_i32, %c0_i32_0 : i32, i32
  }
  func.func @transform_2(%arg0: i32) -> (i32, i32) {
    %c0_i32 = arith.constant 0 : i32
    %c0_i32_0 = arith.constant 0 : i32
    %c0_i32_1 = arith.constant 0 : i32
    return %c0_i32, %c0_i32_0 : i32, i32
  }
  func.func @transform_3(%arg0: i32) -> (i32, i32) {
    %c0_i32 = arith.constant 0 : i32
    %c0_i32_0 = arith.constant 0 : i32
    %c0_i32_1 = arith.constant 0 : i32
    return %c0_i32, %c0_i32_0 : i32, i32
  }
  func.func @transform_4(%arg0: i32) -> (i32, i32) {
    %c0_i32 = arith.constant 0 : i32
    %c0_i32_0 = arith.constant 0 : i32
    %c0_i32_1 = arith.constant 0 : i32
    return %c0_i32, %c0_i32_0 : i32, i32
  }
  func.func @transform_5(%arg0: i32) -> (i32, i32) {
    %c0_i32 = arith.constant 0 : i32
    %c0_i32_0 = arith.constant 0 : i32
    %c0_i32_1 = arith.constant 0 : i32
    return %c0_i32, %c0_i32_0 : i32, i32
  }
  func.func @transform_6(%arg0: i32) -> (i32, i32) {
    %c0_i32 = arith.constant 0 : i32
    %c0_i32_0 = arith.constant 0 : i32
    %c0_i32_1 = arith.constant 0 : i32
    return %c0_i32, %c0_i32_0 : i32, i32
  }
  func.func @transform_7(%arg0: i32) -> (i32, i32) {
    %c0_i32 = arith.constant 0 : i32
    %c0_i32_0 = arith.constant 0 : i32
    return %arg0, %c0_i32 : i32, i32
  }
}

</mosaic_0001>

<llo_original>
// kernel: tpu_custom_call.1
$region0: #{tpu_custom_call.1}
  #allocation0 [shape = 'u32[]', space=smem, size = 0x4, offset = 0x4, fixed_abs, tag = 'smem constant byte address 0x4 - core index']
  #allocation1 [shape = 'u32[72,128]{1,0:T(1,128)}', space=vmem, size = 0x9000, scoped, tag = 'internal scratch']
  %s0 = inlined_call_operand.hbm [shape: bf16[8,32], index: 0, kind: input, shape index: {}]
  %s1 = inlined_call_operand.hbm [shape: bf16[32,128], index: 1, kind: input, shape index: {}]
  %s2 = inlined_call_operand.vmem [shape: f32[1,128], index: 2, kind: input, shape index: {}]
  %s3 = inlined_call_operand.hbm [shape: bf16[128,128], index: 3, kind: input, shape index: {}]
  %s4 = inlined_call_operand.vmem [shape: f32[1,128], index: 4, kind: input, shape index: {}]
  %s5 = inlined_call_operand.hbm [shape: bf16[128,128], index: 5, kind: input, shape index: {}]
  %s6 = inlined_call_operand.vmem [shape: f32[1,128], index: 6, kind: input, shape index: {}]
  %s7 = inlined_call_operand.hbm [shape: f32[8,128], index: 7, kind: output, shape index: {}]
  %s8 = sld [smem:[#allocation0]]
  $region54: #{tpu_custom_call.1} parent=0
    _
  %s10 = ssub.s32 1, %s8
  %s11 = scalar_select 0, %s10, %s8
  $region1: #{tpu_custom_call.1} parent=0
    #allocation2 [shape = 'u8[2048]{0}', space=vmem, size = 0x800, scoped, tag = 'input window, operand 0, single buffered']
    #allocation3 [shape = 's32[1]{0}', space=sflag, size = 0x4, scoped, tag = 'scoped memory for tpu_custom_call.1']
    #allocation4 [shape = 's32[1]{0}', space=sflag, size = 0x4, scoped, tag = 'scoped memory for tpu_custom_call.1']
    #allocation5 [shape = 'u8[8192]{0}', space=vmem, size = 0x2000, scoped, tag = 'input window, operand 1, single buffered']
    #allocation6 [shape = 's32[1]{0}', space=sflag, size = 0x4, scoped, tag = 'scoped memory for tpu_custom_call.1']
    #allocation7 [shape = 'u8[32768]{0}', space=vmem, size = 0x8000, scoped, tag = 'input window, operand 3, single buffered']
    #allocation8 [shape = 'u8[32768]{0}', space=vmem, size = 0x8000, scoped, tag = 'input window, operand 5, single buffered']
    #allocation9 [shape = 's32[1]{0}', space=sflag, size = 0x4, scoped, tag = 'scoped memory for tpu_custom_call.1']
    #allocation10 [shape = 'u8[4096]{0}', space=vmem, size = 0x1000, scoped, tag = 'output window, operand 0, single buffered']
    %12 = vsyncpa [#allocation3], 0
    %13 = vsyncpa [#allocation6], 0
    %14 = vsyncpa [#allocation9], 0
    %15 = vsyncpa [#allocation4], 0
    // Predicated region
    $region2: #{tpu_custom_call.1} parent=1 // pred_check
      _
    $region3: #{tpu_custom_call.1} parent=1 // pred_check_branch
      %17 = sbr.rel (0) target = $region5
    $region4: #{tpu_custom_call.1} parent=1 // pred_region
      %19 = vsyncadd [#allocation3], 0
      %s21 = sshll.u32 %s0, 4
      %s22 = int_to_ptr.hbm [resolvable:$true] %s21
      %s23 = sshll.u32 [#allocation2], 4
      %s24 = int_to_ptr.vmem [resolvable:$true] %s23
      %26 = dma.hbm_to_vmem [thread:$0]  %s22, 64, %s24, [#allocation3]
    $region5: #{tpu_custom_call.1} parent=1 // pred_fallthru
      _
    // Predicated region
    $region6: #{tpu_custom_call.1} parent=1 // pred_check
      _
    $region7: #{tpu_custom_call.1} parent=1 // pred_check_branch
      %28 = sbr.rel (0) target = $region9
    $region8: #{tpu_custom_call.1} parent=1 // pred_region
      %30 = vsyncadd [#allocation6], 0
      %s31 = sshll.u32 %s1, 4
      %s32 = int_to_ptr.hbm [resolvable:$true] %s31
      %s33 = sshll.u32 [#allocation5], 4
      %s34 = int_to_ptr.vmem [resolvable:$true] %s33
      %39 = dma.hbm_to_vmem [thread:$0]  %s32, 256, %s34, [#allocation6], 64, 64, 4
    $region9: #{tpu_custom_call.1} parent=1 // pred_fallthru
      _
    // Predicated region
    $region10: #{tpu_custom_call.1} parent=1 // pred_check
      _
    $region11: #{tpu_custom_call.1} parent=1 // pred_check_branch
      %41 = sbr.rel (0) target = $region13
    $region12: #{tpu_custom_call.1} parent=1 // pred_region
      _
    $region13: #{tpu_custom_call.1} parent=1 // pred_fallthru
      _
    // Predicated region
    $region14: #{tpu_custom_call.1} parent=1 // pred_check
      _
    $region15: #{tpu_custom_call.1} parent=1 // pred_check_branch
      %43 = sbr.rel (0) target = $region17
    $region16: #{tpu_custom_call.1} parent=1 // pred_region
      %45 = vsyncadd [#allocation6], 0
      %s46 = sshll.u32 %s3, 4
      %s47 = int_to_ptr.hbm [resolvable:$true] %s46
      %s48 = sshll.u32 [#allocation7], 4
      %s49 = int_to_ptr.vmem [resolvable:$true] %s48
      %54 = dma.hbm_to_vmem [thread:$0]  %s47, 1024, %s49, [#allocation6], 64, 64, 4
    $region17: #{tpu_custom_call.1} parent=1 // pred_fallthru
      _
    // Predicated region
    $region18: #{tpu_custom_call.1} parent=1 // pred_check
      _
    $region19: #{tpu_custom_call.1} parent=1 // pred_check_branch
      %56 = sbr.rel (0) target = $region21
    $region20: #{tpu_custom_call.1} parent=1 // pred_region
      _
    $region21: #{tpu_custom_call.1} parent=1 // pred_fallthru
      _
    // Predicated region
    $region22: #{tpu_custom_call.1} parent=1 // pred_check
      _
    $region23: #{tpu_custom_call.1} parent=1 // pred_check_branch
      %58 = sbr.rel (0) target = $region25
    $region24: #{tpu_custom_call.1} parent=1 // pred_region
      %60 = vsyncadd [#allocation9], 0
      %s61 = sshll.u32 %s5, 4
      %s62 = int_to_ptr.hbm [resolvable:$true] %s61
      %s63 = sshll.u32 [#allocation8], 4
      %s64 = int_to_ptr.vmem [resolvable:$true] %s63
      %69 = dma.hbm_to_vmem [thread:$0]  %s62, 1024, %s64, [#allocation9], 64, 64, 4
    $region25: #{tpu_custom_call.1} parent=1 // pred_fallthru
      _
    // Predicated region
    $region26: #{tpu_custom_call.1} parent=1 // pred_check
      _
    $region27: #{tpu_custom_call.1} parent=1 // pred_check_branch
      %71 = sbr.rel (0) target = $region29
    $region28: #{tpu_custom_call.1} parent=1 // pred_region
      _
    $region29: #{tpu_custom_call.1} parent=1 // pred_fallthru
      _
    // Predicated region
    $region30: #{tpu_custom_call.1} parent=1 // pred_check
      _
    $region31: #{tpu_custom_call.1} parent=1 // pred_check_branch
      %73 = sbr.rel (0) target = $region33
    $region32: #{tpu_custom_call.1} parent=1 // pred_region
      %75 = dma.done [#allocation3], 64
    $region33: #{tpu_custom_call.1} parent=1 // pred_fallthru
      _
    // Predicated region
    $region34: #{tpu_custom_call.1} parent=1 // pred_check
      _
    $region35: #{tpu_custom_call.1} parent=1 // pred_check_branch
      %77 = sbr.rel (0) target = $region37
    $region36: #{tpu_custom_call.1} parent=1 // pred_region
      %79 = dma.done [#allocation6], 256
    $region37: #{tpu_custom_call.1} parent=1 // pred_fallthru
      _
    // Predicated region
    $region38: #{tpu_custom_call.1} parent=1 // pred_check
      _
    $region39: #{tpu_custom_call.1} parent=1 // pred_check_branch
      %81 = sbr.rel (0) target = $region41
    $region40: #{tpu_custom_call.1} parent=1 // pred_region
      %83 = dma.done [#allocation6], 1024
    $region41: #{tpu_custom_call.1} parent=1 // pred_fallthru
      _
    // Predicated region
    $region42: #{tpu_custom_call.1} parent=1 // pred_check
      _
    $region43: #{tpu_custom_call.1} parent=1 // pred_check_branch
      %85 = sbr.rel (0) target = $region45
    $region44: #{tpu_custom_call.1} parent=1 // pred_region
      %87 = dma.done [#allocation9], 1024
    $region45: #{tpu_custom_call.1} parent=1 // pred_fallthru
      _
    %v89 = vld [vmem:[#allocation2] sm:$0xf]
    %v90 = vld [vmem:[#allocation5] sm:$0xf]
    %v91 = vld [vmem:[#allocation5 + $0x4] sm:$0xf]
    %v92 = vld [vmem:[#allocation5 + $0x8] sm:$0xf]
    %v93 = vld [vmem:[#allocation5 + $0xc] sm:$0xf]
    %v94 = vld [vmem:[%s2] sm:$0x1]
    %v96 = vperm.slane %v94, 0
    %v102 = vunpack.c.l.b16 %v90
    %v103 = vunpack.c.l.b16 %v91
    %v104 = vunpack.c.l.b16 %v92
    %v105 = vunpack.c.l.b16 %v93
    %v106 = vpack.c.b16 %v103, %v102
    %v107 = vpack.c.b16 %v105, %v104
    %vm110 = vcmask 261120
    %v112 = vsel %vm110, %v89, 0
    %114 = vmatpush.bf16.msra.mxu0 0
    %115 = vmatpush.bf16.msra.mxu0 0
    %116 = vmatpush.bf16.msra.mxu0 0
    %117 = vmatpush.bf16.msra.mxu0 0
    %118 = vmatpush.bf16.msra.mxu0 0
    %119 = vmatpush.bf16.msra.mxu0 0
    %120 = vmatpush.bf16.msra.mxu0 %v107
    %121 = vmatpush.bf16.msra.mxu0 %v106
    %122 = vmatmul.bf16.gmra.mxu0 %v112
    %v123 = vpop.f32.mrf.mxu0
    %v124 = vadd.f32 %v96, %v123
    %v125 = vpop.f32.mrf.mxu0
    %126 = vdwg.mxu0
    %v127 = vmax.f32 %v124, 0.0
    %v128 = vpack.c.bf16 %v127, %v127
    %v129 = vld [vmem:[#allocation7] sm:$0xf]
    %v130 = vld [vmem:[#allocation7 + $0x4] sm:$0xf]
    %v131 = vld [vmem:[#allocation7 + $0x8] sm:$0xf]
    %v132 = vld [vmem:[#allocation7 + $0xc] sm:$0xf]
    %v133 = vld [vmem:[#allocation7 + $0x10] sm:$0xf]
    %v134 = vld [vmem:[#allocation7 + $0x14] sm:$0xf]
    %v135 = vld [vmem:[#allocation7 + $0x18] sm:$0xf]
    %v136 = vld [vmem:[#allocation7 + $0x1c] sm:$0xf]
    %v137 = vld [vmem:[#allocation7 + $0x20] sm:$0xf]
    %v138 = vld [vmem:[#allocation7 + $0x24] sm:$0xf]
    %v139 = vld [vmem:[#allocation7 + $0x28] sm:$0xf]
    %v140 = vld [vmem:[#allocation7 + $0x2c] sm:$0xf]
    %v141 = vld [vmem:[#allocation7 + $0x30] sm:$0xf]
    %v142 = vld [vmem:[#allocation7 + $0x34] sm:$0xf]
    %v143 = vld [vmem:[#allocation7 + $0x38] sm:$0xf]
    %v144 = vld [vmem:[#allocation7 + $0x3c] sm:$0xf]
    %v145 = vld [vmem:[%s4] sm:$0x1]
    %v147 = vperm.slane %v145, 0
    %v165 = vunpack.c.l.b16 %v129
    %v166 = vunpack.c.l.b16 %v130
    %v167 = vunpack.c.l.b16 %v131
    %v168 = vunpack.c.l.b16 %v132
    %v169 = vunpack.c.l.b16 %v133
    %v170 = vunpack.c.l.b16 %v134
    %v171 = vunpack.c.l.b16 %v135
    %v172 = vunpack.c.l.b16 %v136
    %v173 = vunpack.c.l.b16 %v137
    %v174 = vunpack.c.l.b16 %v138
    %v175 = vunpack.c.l.b16 %v139
    %v176 = vunpack.c.l.b16 %v140
    %v177 = vunpack.c.l.b16 %v141
    %v178 = vunpack.c.l.b16 %v142
    %v179 = vunpack.c.l.b16 %v143
    %v180 = vunpack.c.l.b16 %v144
    %v181 = vpack.c.b16 %v166, %v165
    %v182 = vpack.c.b16 %v168, %v167
    %v183 = vpack.c.b16 %v170, %v169
    %v184 = vpack.c.b16 %v172, %v171
    %v185 = vpack.c.b16 %v174, %v173
    %v186 = vpack.c.b16 %v176, %v175
    %v187 = vpack.c.b16 %v178, %v177
    %v188 = vpack.c.b16 %v180, %v179
    %197 = vmatpush.bf16.msra.mxu0 %v188
    %198 = vmatpush.bf16.msra.mxu0 %v187
    %199 = vmatpush.bf16.msra.mxu0 %v186
    %200 = vmatpush.bf16.msra.mxu0 %v185
    %201 = vmatpush.bf16.msra.mxu0 %v184
    %202 = vmatpush.bf16.msra.mxu0 %v183
    %203 = vmatpush.bf16.msra.mxu0 %v182
    %204 = vmatpush.bf16.msra.mxu0 %v181
    %205 = vmatmul.bf16.gmra.mxu0 %v128
    %v206 = vpop.f32.mrf.mxu0
    %v207 = vadd.f32 %v147, %v206
    %v208 = vpop.f32.mrf.mxu0
    %209 = vdwg.mxu0
    %v210 = vmax.f32 %v207, 0.0
    %v211 = vpack.c.bf16 %v210, %v210
    %v212 = vld [vmem:[#allocation8] sm:$0xf]
    %v213 = vld [vmem:[#allocation8 + $0x4] sm:$0xf]
    %v214 = vld [vmem:[#allocation8 + $0x8] sm:$0xf]
    %v215 = vld [vmem:[#allocation8 + $0xc] sm:$0xf]
    %v216 = vld [vmem:[#allocation8 + $0x10] sm:$0xf]
    %v217 = vld [vmem:[#allocation8 + $0x14] sm:$0xf]
    %v218 = vld [vmem:[#allocation8 + $0x18] sm:$0xf]
    %v219 = vld [vmem:[#allocation8 + $0x1c] sm:$0xf]
    %v220 = vld [vmem:[#allocation8 + $0x20] sm:$0xf]
    %v221 = vld [vmem:[#allocation8 + $0x24] sm:$0xf]
    %v222 = vld [vmem:[#allocation8 + $0x28] sm:$0xf]
    %v223 = vld [vmem:[#allocation8 + $0x2c] sm:$0xf]
    %v224 = vld [vmem:[#allocation8 + $0x30] sm:$0xf]
    %v225 = vld [vmem:[#allocation8 + $0x34] sm:$0xf]
    %v226 = vld [vmem:[#allocation8 + $0x38] sm:$0xf]
    %v227 = vld [vmem:[#allocation8 + $0x3c] sm:$0xf]
    %v228 = vld [vmem:[%s6] sm:$0x1]
    %v230 = vperm.slane %v228, 0
    %v248 = vunpack.c.l.b16 %v212
    %v249 = vunpack.c.l.b16 %v213
    %v250 = vunpack.c.l.b16 %v214
    %v251 = vunpack.c.l.b16 %v215
    %v252 = vunpack.c.l.b16 %v216
    %v253 = vunpack.c.l.b16 %v217
    %v254 = vunpack.c.l.b16 %v218
    %v255 = vunpack.c.l.b16 %v219
    %v256 = vunpack.c.l.b16 %v220
    %v257 = vunpack.c.l.b16 %v221
    %v258 = vunpack.c.l.b16 %v222
    %v259 = vunpack.c.l.b16 %v223
    %v260 = vunpack.c.l.b16 %v224
    %v261 = vunpack.c.l.b16 %v225
    %v262 = vunpack.c.l.b16 %v226
    %v263 = vunpack.c.l.b16 %v227
    %v264 = vpack.c.b16 %v249, %v248
    %v265 = vpack.c.b16 %v251, %v250
    %v266 = vpack.c.b16 %v253, %v252
    %v267 = vpack.c.b16 %v255, %v254
    %v268 = vpack.c.b16 %v257, %v256
    %v269 = vpack.c.b16 %v259, %v258
    %v270 = vpack.c.b16 %v261, %v260
    %v271 = vpack.c.b16 %v263, %v262
    %280 = vmatpush.bf16.msra.mxu0 %v271
    %281 = vmatpush.bf16.msra.mxu0 %v270
    %282 = vmatpush.bf16.msra.mxu0 %v269
    %283 = vmatpush.bf16.msra.mxu0 %v268
    %284 = vmatpush.bf16.msra.mxu0 %v267
    %285 = vmatpush.bf16.msra.mxu0 %v266
    %286 = vmatpush.bf16.msra.mxu0 %v265
    %287 = vmatpush.bf16.msra.mxu0 %v264
    %288 = vmatmul.bf16.gmra.mxu0 %v211
    %v289 = vpop.f32.mrf.mxu0
    %v290 = vadd.f32 %v230, %v289
    %v291 = vpop.f32.mrf.mxu0
    %292 = vdwg.mxu0
    %v293 = vmax.f32 %v290, 0.0
    %294 = vst [vmem:[#allocation10] sm:$0xff] %v293
    // Predicated region
    $region46: #{tpu_custom_call.1} parent=1 // pred_check
      _
    $region47: #{tpu_custom_call.1} parent=1 // pred_check_branch
      %296 = sbr.rel (0) target = $region49
    $region48: #{tpu_custom_call.1} parent=1 // pred_region
      %298 = vsyncadd [#allocation4], 0
      %s300 = sshll.u32 [#allocation10], 4
      %s301 = int_to_ptr.vmem [resolvable:$true] %s300
      %s302 = sshll.u32 %s7, 4
      %s303 = int_to_ptr.hbm [resolvable:$true] %s302
      %305 = dma.vmem_to_hbm [thread:$0]  %s301, 128, %s303, [#allocation4]
    $region49: #{tpu_custom_call.1} parent=1 // pred_fallthru
      _
    // Predicated region
    $region50: #{tpu_custom_call.1} parent=1 // pred_check
      _
    $region51: #{tpu_custom_call.1} parent=1 // pred_check_branch
      %307 = sbr.rel (0) target = $region53
    $region52: #{tpu_custom_call.1} parent=1 // pred_region
      %309 = dma.done [#allocation4], 128
    $region53: #{tpu_custom_call.1} parent=1 // pred_fallthru
      _
    %310 = vsyncpa [#allocation3], 1
    %311 = vsyncpa [#allocation6], 1
    %312 = vsyncpa [#allocation9], 1
    %313 = vsyncpa [#allocation4], 1

</llo_original>
